<compile_context>
chip_gen: v5e
topology: v5e:2x2
jax: 0.10.0
libtpu: 0.0.40
codegen_flags: <defaults>
</compile_context>

<pallas_src>
import jax
import jax.numpy as jnp
from jax.experimental import pallas as pl
from jax.experimental.pallas import tpu as pltpu


def _round_up(a, b):
    return (a + b - 1) // b * b


def _cause_predictor_kernel(x_ref, mask_ref, w1ab_ref, w2t_ref, w3_ref,
                            out_ref, a_scr):
    # x_ref:    (1, L_pad, D)      bf16 — all (padded) tokens of this batch elt
    # mask_ref: (1, TI, L_pad)     bf16 — mask rows of this target tile
    # w1ab_ref: (D, 2*M_pad)       bf16 — [W1_source^T | W1_target^T], zero-padded
    # w2t_ref:  (M_pad, M_pad)     bf16 — W2^T, zero-padded
    # w3_ref:   (1, M_pad)         f32  — predictor weight, zero-padded
    # out_ref:  (1, TI, L_pad)     f32
    # a_scr:    (L_pad, 2*M_pad)   f32  — cached first-layer activations
    t = pl.program_id(1)
    TI = out_ref.shape[1]
    L_pad = out_ref.shape[2]
    M_pad = w3_ref.shape[1]

    # First Linear, fused over both halves, computed once per batch element.
    @pl.when(t == 0)
    def _():
        a_scr[...] = jnp.dot(x_ref[0], w1ab_ref[...],
                             preferred_element_type=jnp.float32)

    i0 = pl.multiple_of(t * TI, TI)
    a_src = a_scr[:, pl.ds(0, M_pad)]                   # (L_pad, M_pad) all sources
    a_tgt = a_scr[pl.ds(i0, TI), pl.ds(M_pad, M_pad)]   # (TI, M_pad) this tile's targets

    # h1[i, j, :] = ReLU(a_tgt[i] + a_src[j])  -> (TI, L_pad, M_pad), f32.
    h1 = jnp.maximum(a_tgt[:, None, :] + a_src[None, :, :], 0.0)
    # Reshape in f32 (sublane-clean since L_pad % 8 == 0), then cast for the MXU.
    h1 = h1.reshape(TI * L_pad, M_pad).astype(jnp.bfloat16)

    # Second Linear + ReLU as one big MXU matmul (bf16 in, f32 accumulate).
    h2 = jnp.maximum(
        jnp.dot(h1, w2t_ref[...], preferred_element_type=jnp.float32), 0.0)

    # Final projection: one broadcast multiply + lane reduction per tile.
    w3 = w3_ref[...][None, :, :]                               # (1, 1, M_pad)
    s = jnp.sum(h2.reshape(TI, L_pad, M_pad) * w3, axis=-1)    # (TI, L_pad)

    out_ref[0] = jax.nn.sigmoid(s) * mask_ref[0].astype(jnp.float32)


def cause_predictor(x, mask, w1, w2, w3):
    """x: (B, L, D) f32, mask: (B, L, L) f32 with 0/1 values.
    w1: (M, 2D), w2: (M, M), w3: (1, M)  (PyTorch nn.Linear weight layout)."""
    B, L, D = x.shape
    M = w1.shape[0]
    assert w1.shape == (M, 2 * D) and w2.shape == (M, M) and w3.shape == (1, M)

    f32, bf16 = jnp.float32, jnp.bfloat16
    M_pad = _round_up(M, 128)
    L8 = _round_up(L, 8)

    # Pick the target-tile size TI: largest of {128,64,32,16,8} whose
    # (TI, L_pad, M_pad) working set stays well inside default scoped VMEM.
    bytes_per_elem = 14            # h1 f32 + h1 bf16 + h2 f32 + reduce temp
    budget = 8 * 1024 * 1024
    TI, L_pad = 8, L8
    for cand in (128, 64, 32, 16, 8):
        lp = _round_up(L, cand)
        if cand <= L8 and cand * lp * M_pad * bytes_per_elem <= budget:
            TI, L_pad = cand, lp
            break
    T = L_pad // TI

    # Weight prep: transpose, zero-pad M to M_pad, fuse the two W1 halves.
    w1a = jnp.zeros((D, M_pad), f32).at[:, :M].set(w1[:, :D].T)
    w1b = jnp.zeros((D, M_pad), f32).at[:, :M].set(w1[:, D:].T)
    w1ab = jnp.concatenate([w1a, w1b], axis=1).astype(bf16)      # (D, 2*M_pad)
    w2t = jnp.zeros((M_pad, M_pad), f32).at[:M, :M].set(w2.T).astype(bf16)
    w3p = jnp.zeros((1, M_pad), f32).at[:, :M].set(w3)           # keep f32

    # Activations / mask: zero-pad L, ship matmul inputs + 0/1 mask as bf16.
    x_p = jnp.zeros((B, L_pad, D), bf16).at[:, :L, :].set(x.astype(bf16))
    mask_p = jnp.zeros((B, L_pad, L_pad), bf16).at[:, :L, :L].set(
        mask.astype(bf16))

    out_padded = pl.pallas_call(
        _cause_predictor_kernel,
        out_shape=jax.ShapeDtypeStruct((B, L_pad, L_pad), f32),
        grid_spec=pltpu.PrefetchScalarGridSpec(
            num_scalar_prefetch=0,
            grid=(B, T),
            in_specs=[
                pl.BlockSpec((1, L_pad, D), lambda b, t: (b, 0, 0)),
                pl.BlockSpec((1, TI, L_pad), lambda b, t: (b, t, 0)),
                pl.BlockSpec((D, 2 * M_pad), lambda b, t: (0, 0)),
                pl.BlockSpec((M_pad, M_pad), lambda b, t: (0, 0)),
                pl.BlockSpec((1, M_pad), lambda b, t: (0, 0)),
            ],
            out_specs=pl.BlockSpec((1, TI, L_pad), lambda b, t: (b, t, 0)),
            scratch_shapes=[pltpu.VMEM((L_pad, 2 * M_pad), jnp.float32)],
        ),
        compiler_params=pltpu.CompilerParams(
            # Batch axis is megacore-parallel; the target-tile axis reuses the
            # per-batch a_scr cache, so it must stay sequential ("arbitrary").
            dimension_semantics=("parallel", "arbitrary")),
    )(x_p, mask_p, w1ab, w2t, w3p)

    return out_padded[:, :L, :L]


def cause_predictor_reference(x, mask, w1, w2, w3):
    """Pure-JAX (f32) replica of the PyTorch forward (eval mode)."""
    B, L, D = x.shape
    x_source = jnp.broadcast_to(x[:, None, :, :], (B, L, L, D))
    x_target = jnp.broadcast_to(x[:, :, None, :], (B, L, L, D))
    x_cat = jnp.concatenate([x_source, x_target], axis=-1)       # (B,L,L,2D)
    h = jax.nn.relu(x_cat @ w1.T)
    h = jax.nn.relu(h @ w2.T)
    s = (h @ w3.T)[..., 0]
    return jax.nn.sigmoid(s) * mask


if __name__ == "__main__":
    B, L, D, M = 2, 8, 16, 32   # batch, conv_len, input_dim, mlp_dim

    key = jax.random.PRNGKey(0)
    kx, km, k1, k2, k3 = jax.random.split(key, 5)

    x = jax.random.normal(kx, (B, L, D), dtype=jnp.float32)
    mask = (jax.random.uniform(km, (B, L, L)) > 0.3).astype(jnp.float32)

    # Deterministic weight init mimicking nn.Linear (uniform(-1/sqrt(fan_in), ..)).
    def linear_init(k, out_f, in_f):
        bound = 1.0 / jnp.sqrt(in_f)
        return jax.random.uniform(k, (out_f, in_f), jnp.float32, -bound, bound)

    w1 = linear_init(k1, M, 2 * D)   # mlp[0]: Linear(2*input_dim, mlp_dim, bias=False)
    w2 = linear_init(k2, M, M)       # mlp[3]: Linear(mlp_dim, mlp_dim, bias=False)
    w3 = linear_init(k3, 1, M)       # predictor_weight: Linear(mlp_dim, 1, bias=False)

    out = cause_predictor(x, mask, w1, w2, w3)
    out = jax.block_until_ready(out)

    ref = cause_predictor_reference(x, mask, w1, w2, w3)
    assert out.shape == (B, L, L)
    err = float(jnp.max(jnp.abs(out - ref)))
    # bf16 MXU inputs (f32 accumulation) -> relaxed tolerance vs f32 reference.
    assert err < 2e-2, f"max abs err {err}"

    print("KERNEL_OK")
</pallas_src>

<mosaic_0001>
module attributes {stable_mosaic.version = 11 : i64} {
  func.func @_cause_predictor_kernel(%arg0: i32, %arg1: i32, %arg2: memref<1x8x16xbf16, #tpu.memory_space<vmem>>, %arg3: memref<1x8x8xbf16, #tpu.memory_space<vmem>>, %arg4: memref<16x256xbf16, #tpu.memory_space<vmem>>, %arg5: memref<128x128xbf16, #tpu.memory_space<vmem>>, %arg6: memref<1x128xf32, #tpu.memory_space<vmem>>, %arg7: memref<1x8x8xf32, #tpu.memory_space<vmem>>, %arg8: memref<8x256xf32, #tpu.memory_space<vmem>>) attributes {dimension_semantics = [#tpu.dimension_semantics<parallel>, #tpu.dimension_semantics<arbitrary>], iteration_bounds = array<i64: 2, 1>, scalar_prefetch = 0 : i64, scratch_operands = 1 : i64, tpu.core_type = #tpu.core_type<tc>, window_params = [{transform_indices = @transform_0, window_bounds = array<i64: 1, 8, 16>}, {transform_indices = @transform_1, window_bounds = array<i64: 1, 8, 8>}, {pipeline_mode = #tpu.pipeline_mode<synchronous>, transform_indices = @transform_2, window_bounds = array<i64: 16, 256>}, {pipeline_mode = #tpu.pipeline_mode<synchronous>, transform_indices = @transform_3, window_bounds = array<i64: 128, 128>}, {pipeline_mode = #tpu.pipeline_mode<synchronous>, transform_indices = @transform_4, window_bounds = array<i64: 1, 128>}, {transform_indices = @transform_5, window_bounds = array<i64: 1, 8, 8>}]} {
    %c0_i32 = arith.constant 0 : i32
    %0 = arith.cmpi eq, %arg1, %c0_i32 : i32
    %1 = arith.extui %0 : i1 to i32
    %c0_i32_0 = arith.constant 0 : i32
    %2 = arith.cmpi ne, %1, %c0_i32_0 : i32
    scf.if %2 {
      %c0_16 = arith.constant 0 : index
      %c0_17 = arith.constant 0 : index
      %c0_18 = arith.constant 0 : index
      %39 = vector.load %arg2[%c0_16, %c0_17, %c0_18] : memref<1x8x16xbf16, #tpu.memory_space<vmem>>, vector<1x8x16xbf16>
      %40 = vector.shape_cast %39 : vector<1x8x16xbf16> to vector<8x16xbf16>
      %c0_19 = arith.constant 0 : index
      %c0_20 = arith.constant 0 : index
      %41 = vector.load %arg4[%c0_19, %c0_20] : memref<16x256xbf16, #tpu.memory_space<vmem>>, vector<16x256xbf16>
      %cst_21 = arith.constant dense<0.000000e+00> : vector<8x256xf32>
      %42 = tpu.matmul %40, %41, %cst_21 {dimension_numbers = #tpu.dot_dimension_numbers<[1], [0], [0], [1], [0, 0, 1, 1], [], []>} : vector<8x16xbf16>, vector<16x256xbf16>, vector<8x256xf32> -> vector<8x256xf32>
      %c0_22 = arith.constant 0 : index
      %c0_23 = arith.constant 0 : index
      %43 = vector.load %arg8[%c0_22, %c0_23] : memref<8x256xf32, #tpu.memory_space<vmem>>, vector<8x256xf32>
      tpu.vector_store %arg8[%c0_22, %c0_23], %42 {strides = array<i32>} : memref<8x256xf32, #tpu.memory_space<vmem>>, vector<8x256xf32>,
    } else {
    }
    %c8_i32 = arith.constant 8 : i32
    %3 = arith.muli %arg1, %c8_i32 : i32
    %4 = tpu.assume_multiple %3, 8 : i32
    %c0 = arith.constant 0 : index
    %c0_1 = arith.constant 0 : index
    %5 = vector.load %arg8[%c0, %c0_1] : memref<8x256xf32, #tpu.memory_space<vmem>>, vector<8x128xf32>
    %6 = arith.index_cast %4 : i32 to index
    %c128 = arith.constant 128 : index
    %7 = vector.load %arg8[%6, %c128] : memref<8x256xf32, #tpu.memory_space<vmem>>, vector<8x128xf32>
    %8 = vector.shape_cast %7 : vector<8x128xf32> to vector<8x1x128xf32>
    %9 = vector.shape_cast %5 : vector<8x128xf32> to vector<1x8x128xf32>
    %10 = vector.broadcast %8 : vector<8x1x128xf32> to vector<8x8x128xf32>
    %11 = vector.broadcast %9 : vector<1x8x128xf32> to vector<8x8x128xf32>
    %12 = arith.addf %10, %11 : vector<8x8x128xf32>
    %cst = arith.constant 0.000000e+00 : f32
    %13 = vector.broadcast %cst : f32 to vector<8x8x128xf32>
    %14 = arith.maximumf %12, %13 : vector<8x8x128xf32>
    %15 = vector.shape_cast %14 : vector<8x8x128xf32> to vector<64x128xf32>
    %16 = arith.truncf %15 : vector<64x128xf32> to vector<64x128xbf16>
    %c0_2 = arith.constant 0 : index
    %c0_3 = arith.constant 0 : index
    %17 = vector.load %arg5[%c0_2, %c0_3] : memref<128x128xbf16, #tpu.memory_space<vmem>>, vector<128x128xbf16>
    %cst_4 = arith.constant dense<0.000000e+00> : vector<64x128xf32>
    %18 = tpu.matmul %16, %17, %cst_4 {dimension_numbers = #tpu.dot_dimension_numbers<[1], [0], [0], [1], [0, 0, 1, 1], [], []>} : vector<64x128xbf16>, vector<128x128xbf16>, vector<64x128xf32> -> vector<64x128xf32>
    %cst_5 = arith.constant 0.000000e+00 : f32
    %19 = vector.broadcast %cst_5 : f32 to vector<64x128xf32>
    %20 = arith.maximumf %18, %19 : vector<64x128xf32>
    %c0_6 = arith.constant 0 : index
    %c0_7 = arith.constant 0 : index
    %21 = vector.load %arg6[%c0_6, %c0_7] : memref<1x128xf32, #tpu.memory_space<vmem>>, vector<1x128xf32>
    %22 = vector.shape_cast %21 : vector<1x128xf32> to vector<1x1x128xf32>
    %23 = vector.shape_cast %20 : vector<64x128xf32> to vector<8x8x128xf32>
    %24 = vector.broadcast %22 : vector<1x1x128xf32> to vector<8x8x128xf32>
    %25 = arith.mulf %23, %24 : vector<8x8x128xf32>
    %cst_8 = arith.constant dense<0.000000e+00> : vector<8x8xf32>
    %26 = vector.multi_reduction <add>, %25, %cst_8 [2] : vector<8x8x128xf32> to vector<8x8xf32>
    %27 = arith.negf %26 : vector<8x8xf32>
    %28 = math.exp %27 : vector<8x8xf32>
    %cst_9 = arith.constant 1.000000e+00 : f32
    %29 = vector.broadcast %cst_9 : f32 to vector<8x8xf32>
    %30 = arith.addf %29, %28 : vector<8x8xf32>
    %31 = arith.divf %29, %30 : vector<8x8xf32>
    %c0_10 = arith.constant 0 : index
    %c0_11 = arith.constant 0 : index
    %c0_12 = arith.constant 0 : index
    %32 = vector.load %arg3[%c0_10, %c0_11, %c0_12] : memref<1x8x8xbf16, #tpu.memory_space<vmem>>, vector<1x8x8xbf16>
    %33 = vector.shape_cast %32 : vector<1x8x8xbf16> to vector<8x8xbf16>
    %34 = arith.extf %33 : vector<8x8xbf16> to vector<8x8xf32>
    %35 = arith.mulf %31, %34 : vector<8x8xf32>
    %c0_13 = arith.constant 0 : index
    %c0_14 = arith.constant 0 : index
    %c0_15 = arith.constant 0 : index
    %36 = vector.load %arg7[%c0_13, %c0_14, %c0_15] : memref<1x8x8xf32, #tpu.memory_space<vmem>>, vector<1x8x8xf32>
    %37 = vector.shape_cast %36 : vector<1x8x8xf32> to vector<8x8xf32>
    %38 = vector.shape_cast %35 : vector<8x8xf32> to vector<1x8x8xf32>
    tpu.vector_store %arg7[%c0_13, %c0_14, %c0_15], %38 {strides = array<i32>} : memref<1x8x8xf32, #tpu.memory_space<vmem>>, vector<1x8x8xf32>,
    return
  }
  func.func @transform_0(%arg0: i32, %arg1: i32) -> (i32, i32, i32) {
    %c0_i32 = arith.constant 0 : i32
    %c0_i32_0 = arith.constant 0 : i32
    %c0_i32_1 = arith.constant 0 : i32
    return %arg0, %c0_i32, %c0_i32_0 : i32, i32, i32
  }
  func.func @transform_1(%arg0: i32, %arg1: i32) -> (i32, i32, i32) {
    %c0_i32 = arith.constant 0 : i32
    %c0_i32_0 = arith.constant 0 : i32
    return %arg0, %arg1, %c0_i32 : i32, i32, i32
  }
  func.func @transform_2(%arg0: i32, %arg1: i32) -> (i32, i32) {
    %c0_i32 = arith.constant 0 : i32
    %c0_i32_0 = arith.constant 0 : i32
    %c0_i32_1 = arith.constant 0 : i32
    return %c0_i32, %c0_i32_0 : i32, i32
  }
  func.func @transform_3(%arg0: i32, %arg1: i32) -> (i32, i32) {
    %c0_i32 = arith.constant 0 : i32
    %c0_i32_0 = arith.constant 0 : i32
    %c0_i32_1 = arith.constant 0 : i32
    return %c0_i32, %c0_i32_0 : i32, i32
  }
  func.func @transform_4(%arg0: i32, %arg1: i32) -> (i32, i32) {
    %c0_i32 = arith.constant 0 : i32
    %c0_i32_0 = arith.constant 0 : i32
    %c0_i32_1 = arith.constant 0 : i32
    return %c0_i32, %c0_i32_0 : i32, i32
  }
  func.func @transform_5(%arg0: i32, %arg1: i32) -> (i32, i32, i32) {
    %c0_i32 = arith.constant 0 : i32
    %c0_i32_0 = arith.constant 0 : i32
    return %arg0, %arg1, %c0_i32 : i32, i32, i32
  }
}

</mosaic_0001>

<llo_original>
// kernel: tpu_custom_call.1
$region0: #{tpu_custom_call.1}
  #allocation0 [shape = 'u32[]', space=smem, size = 0x4, offset = 0x4, fixed_abs, tag = 'smem constant byte address 0x4 - core index']
  #allocation1 [shape = 'u32[72,128]{1,0:T(1,128)}', space=vmem, size = 0x9000, scoped, tag = 'internal scratch']
  #allocation2 [shape = 'f32[8,256]{1,0:T(8,128)}', space=vmem, size = 0x2000, scoped, tag = 'scratch operand']
  %s0 = inlined_call_operand.hbm [shape: bf16[2,8,16], index: 0, kind: input, shape index: {}]
  %s1 = inlined_call_operand.hbm [shape: bf16[2,8,8], index: 1, kind: input, shape index: {}]
  %s2 = inlined_call_operand.hbm [shape: bf16[16,256], index: 2, kind: input, shape index: {}]
  %s3 = inlined_call_operand.hbm [shape: bf16[128,128], index: 3, kind: input, shape index: {}]
  %s4 = inlined_call_operand.vmem [shape: f32[1,128], index: 4, kind: input, shape index: {}]
  %s5 = inlined_call_operand.hbm [shape: f32[2,8,8], index: 5, kind: output, shape index: {}]
  %s6 = sld [smem:[#allocation0]]
  $region73: #{tpu_custom_call.1} parent=0
    _
  %s8 = ssub.s32 1, %s6
  %s9 = scalar_select 0, %s8, %s6
  $region1: #{tpu_custom_call.1} parent=0
    #allocation3 [shape = 'u8[4096]{0}', space=vmem, size = 0x1000, scoped, tag = 'input window, operand 0']
    #allocation4 [shape = 's32[2]{0}', space=sflag, size = 0x8, scoped, tag = 'scoped memory for tpu_custom_call.1']
    #allocation5 [shape = 's32[2]{0}', space=sflag, size = 0x8, scoped, tag = 'scoped memory for tpu_custom_call.1']
    #allocation6 [shape = 'u8[4096]{0}', space=vmem, size = 0x1000, scoped, tag = 'input window, operand 1']
    #allocation7 [shape = 's32[2]{0}', space=sflag, size = 0x8, scoped, tag = 'scoped memory for tpu_custom_call.1']
    #allocation8 [shape = 'u8[8192]{0}', space=vmem, size = 0x2000, scoped, tag = 'input window, operand 2, single buffered']
    #allocation9 [shape = 'u8[32768]{0}', space=vmem, size = 0x8000, scoped, tag = 'input window, operand 3, single buffered']
    #allocation10 [shape = 's32[1]{0}', space=sflag, size = 0x4, scoped, tag = 'scoped memory for tpu_custom_call.1']
    #allocation11 [shape = 'u8[8192]{0}', space=vmem, size = 0x2000, scoped, tag = 'output window, operand 0']
    %10 = vsyncpa [#allocation4], 0
    %s11 = scalar_lea.sflag [#allocation4], 1
    %12 = vsyncpa %s11, 0
    %13 = vsyncpa [#allocation7], 0
    %s14 = scalar_lea.sflag [#allocation7], 1
    %15 = vsyncpa %s14, 0
    %16 = vsyncpa [#allocation10], 0
    %17 = vsyncpa [#allocation5], 0
    %s18 = scalar_lea.sflag [#allocation5], 1
    %19 = vsyncpa %s18, 0
    loop: start=0, step=1, limit=4
    $region2: #{tpu_custom_call.1} parent=1 // loop_pre_header
      _
    $region3: #{tpu_custom_call.1} parent=1 // loop_header
      %s21 = sphi 0, %s25
      %p22 = scmp.ge.s32.totalorder %s21, 4
      %s28 = sphi 0, %s40
      %s29 = sphi 0, %s36
      %s30 = sphi 0, %s28
      %s31 = sphi 0, %s29
      %s32 = sphi 0, %s30
      %s33 = sphi 0, %s31
      %s43 = sphi 0, %s45
      %s46 = sphi 0, %s43
      %s47 = sphi 0, %s46
      %s63 = sphi 0, %s47
      %s71 = sphi 0, %s73
      %s74 = sphi 0, %s71
      %s75 = sphi 0, %s74
      %s91 = sphi 0, %s75
      %s95 = sphi 0, %s95
      %s97 = sphi 0, %s95
      %s98 = sphi 0, %s97
      %s112 = sphi 0, %s98
      %s116 = sphi 0, %s116
      %s118 = sphi 0, %s116
      %s119 = sphi 0, %s118
      %s133 = sphi 0, %s119
      %s137 = sphi 0, %s137
      %s139 = sphi 0, %s137
      %s140 = sphi 0, %s139
      %s154 = sphi 0, %s140
      %s162 = sphi 0, %s164
      %s165 = sphi 0, %s162
      %s166 = sphi 0, %s165
      %s182 = sphi 0, %s166
    $region4: #{tpu_custom_call.1} parent=1 // loop_header_branch
      %24 = sbr.rel (%p22) target = $region8
    $region5: #{tpu_custom_call.1} parent=1 // loop_body
      %s26 = ssub.s32 %s21, 1
      %s27 = ssub.s32 %s21, 2
      %s34 = sadd.s32 1, %s29
      %p35 = scmp.ge.s32.totalorder %s34, 1
      %s36 = scalar_select %p35, 0, %s34
      %s37 = sadd.s32 1, %s28
      %s38 = scalar_select %p35, %s37, %s28
      %p39 = scmp.ge.s32.totalorder %s38, 2
      %s40 = scalar_select %p39, 0, %s38
      %s41 = ssub.s32 %s28, %s40
      %p42 = scmp.eq.s32.totalorder %s41, 0
      %s44 = sadd.s32 %s43, 1
      %s45 = scalar_select %p42, %s43, %s44
      %p48 = pneg %p42
      %p49 = scmp.eq.s32.totalorder %s21, 1
      %p50 = por %p48, %p49
      %p51 = scmp.ne.s32.totalorder %s43, %s46
      %p52 = scmp.eq.s32.totalorder %s21, 0
      %p53 = por %p51, %p52
      %p54 = scmp.ne.s32.totalorder %s43, %s46
      %p55 = scmp.eq.s32.totalorder %s26, 1
      %p56 = por %p54, %p55
      %p57 = scmp.ne.s32.totalorder %s46, %s47
      %p58 = scmp.eq.s32.totalorder %s26, 0
      %p59 = por %p57, %p58
      %p60 = scmp.ne.s32.totalorder %s46, %s47
      %p61 = scmp.eq.s32.totalorder %s27, 1
      %p62 = por %p60, %p61
      %p64 = scmp.ne.s32.totalorder %s47, %s63
      %p65 = scmp.eq.s32.totalorder %s27, 0
      %p66 = por %p64, %p65
      %s67 = ssub.s32 %s28, %s40
      %s68 = ssub.s32 %s29, %s36
      %s69 = sor.u32 %s67, %s68
      %p70 = scmp.eq.s32.totalorder %s69, 0
      %s72 = sadd.s32 %s71, 1
      %s73 = scalar_select %p70, %s71, %s72
      %p76 = pneg %p70
      %p77 = scmp.eq.s32.totalorder %s21, 1
      %p78 = por %p76, %p77
      %p79 = scmp.ne.s32.totalorder %s71, %s74
      %p80 = scmp.eq.s32.totalorder %s21, 0
      %p81 = por %p79, %p80
      %p82 = scmp.ne.s32.totalorder %s71, %s74
      %p83 = scmp.eq.s32.totalorder %s26, 1
      %p84 = por %p82, %p83
      %p85 = scmp.ne.s32.totalorder %s74, %s75
      %p86 = scmp.eq.s32.totalorder %s26, 0
      %p87 = por %p85, %p86
      %p88 = scmp.ne.s32.totalorder %s74, %s75
      %p89 = scmp.eq.s32.totalorder %s27, 1
      %p90 = por %p88, %p89
      %p92 = scmp.ne.s32.totalorder %s75, %s91
      %p93 = scmp.eq.s32.totalorder %s27, 0
      %p94 = por %p92, %p93
      %s96 = sadd.s32 %s95, 1
      %p99 = scmp.eq.s32.totalorder %s21, 1
      %p100 = scmp.ne.s32.totalorder %s95, %s97
      %p101 = scmp.eq.s32.totalorder %s21, 0
      %p102 = por %p100, %p101
      %p103 = scmp.ne.s32.totalorder %s95, %s97
      %p104 = scmp.eq.s32.totalorder %s26, 1
      %p105 = por %p103, %p104
      %p106 = scmp.ne.s32.totalorder %s97, %s98
      %p107 = scmp.eq.s32.totalorder %s26, 0
      %p108 = por %p106, %p107
      %p109 = scmp.ne.s32.totalorder %s97, %s98
      %p110 = scmp.eq.s32.totalorder %s27, 1
      %p111 = por %p109, %p110
      %p113 = scmp.ne.s32.totalorder %s98, %s112
      %p114 = scmp.eq.s32.totalorder %s27, 0
      %p115 = por %p113, %p114
      %s117 = sadd.s32 %s116, 1
      %p120 = scmp.eq.s32.totalorder %s21, 1
      %p121 = scmp.ne.s32.totalorder %s116, %s118
      %p122 = scmp.eq.s32.totalorder %s21, 0
      %p123 = por %p121, %p122
      %p124 = scmp.ne.s32.totalorder %s116, %s118
      %p125 = scmp.eq.s32.totalorder %s26, 1
      %p126 = por %p124, %p125
      %p127 = scmp.ne.s32.totalorder %s118, %s119
      %p128 = scmp.eq.s32.totalorder %s26, 0
      %p129 = por %p127, %p128
      %p130 = scmp.ne.s32.totalorder %s118, %s119
      %p131 = scmp.eq.s32.totalorder %s27, 1
      %p132 = por %p130, %p131
      %p134 = scmp.ne.s32.totalorder %s119, %s133
      %p135 = scmp.eq.s32.totalorder %s27, 0
      %p136 = por %p134, %p135
      %s138 = sadd.s32 %s137, 1
      %p141 = scmp.eq.s32.totalorder %s21, 1
      %p142 = scmp.ne.s32.totalorder %s137, %s139
      %p143 = scmp.eq.s32.totalorder %s21, 0
      %p144 = por %p142, %p143
      %p145 = scmp.ne.s32.totalorder %s137, %s139
      %p146 = scmp.eq.s32.totalorder %s26, 1
      %p147 = por %p145, %p146
      %p148 = scmp.ne.s32.totalorder %s139, %s140
      %p149 = scmp.eq.s32.totalorder %s26, 0
      %p150 = por %p148, %p149
      %p151 = scmp.ne.s32.totalorder %s139, %s140
      %p152 = scmp.eq.s32.totalorder %s27, 1
      %p153 = por %p151, %p152
      %p155 = scmp.ne.s32.totalorder %s140, %s154
      %p156 = scmp.eq.s32.totalorder %s27, 0
      %p157 = por %p155, %p156
      %s158 = ssub.s32 %s28, %s40
      %s159 = ssub.s32 %s29, %s36
      %s160 = sor.u32 %s158, %s159
      %p161 = scmp.eq.s32.totalorder %s160, 0
      %s163 = sadd.s32 %s162, 1
      %s164 = scalar_select %p161, %s162, %s163
      %p167 = pneg %p161
      %p168 = scmp.eq.s32.totalorder %s21, 1
      %p169 = por %p167, %p168
      %p170 = scmp.ne.s32.totalorder %s162, %s165
      %p171 = scmp.eq.s32.totalorder %s21, 0
      %p172 = por %p170, %p171
      %p173 = scmp.ne.s32.totalorder %s162, %s165
      %p174 = scmp.eq.s32.totalorder %s26, 1
      %p175 = por %p173, %p174
      %p176 = scmp.ne.s32.totalorder %s165, %s166
      %p177 = scmp.eq.s32.totalorder %s26, 0
      %p178 = por %p176, %p177
      %p179 = scmp.ne.s32.totalorder %s165, %s166
      %p180 = scmp.eq.s32.totalorder %s27, 1
      %p181 = por %p179, %p180
      %p183 = scmp.ne.s32.totalorder %s166, %s182
      %p184 = scmp.eq.s32.totalorder %s27, 0
      %p185 = por %p183, %p184
      %p186 = scmp.le.s32.totalorder 1, %s21
      %p187 = scmp.lt.s32.totalorder %s21, 3
      %p188 = pnand %p186, %p187
      %p189 = pneg %p188
      // Predicated region
      $region9: #{tpu_custom_call.1} parent=5 // pred_check
        _
      $region10: #{tpu_custom_call.1} parent=5 // pred_check_branch
        %191 = sbr.rel (%p188) target = $region12
      $region11: #{tpu_custom_call.1} parent=5 // pred_region
        %s192 = ssub.s32 %s21, 1
        // Predicated region
        $region13: #{tpu_custom_call.1} parent=11 // pred_check
          %p193 = pneg %p108
        $region14: #{tpu_custom_call.1} parent=11 // pred_check_branch
          %195 = sbr.rel (%p193) target = $region16
        $region15: #{tpu_custom_call.1} parent=11 // pred_region
          %197 = vsyncadd [#allocation7], 0
          %s198 = sshll.u32 %s2, 4
          %s199 = int_to_ptr.hbm [resolvable:$true] %s198
          %s200 = sshll.u32 [#allocation8], 4
          %s201 = int_to_ptr.vmem [resolvable:$true] %s200
          %206 = dma.hbm_to_vmem [thread:$0]  %s199, 256, %s201, [#allocation7], 128, 128, 8
        $region16: #{tpu_custom_call.1} parent=11 // pred_fallthru
          _
        // Predicated region
        $region17: #{tpu_custom_call.1} parent=11 // pred_check
          %p207 = pneg %p129
        $region18: #{tpu_custom_call.1} parent=11 // pred_check_branch
          %209 = sbr.rel (%p207) target = $region20
        $region19: #{tpu_custom_call.1} parent=11 // pred_region
          %211 = vsyncadd [#allocation10], 0
          %s212 = sshll.u32 %s3, 4
          %s213 = int_to_ptr.hbm [resolvable:$true] %s212
          %s214 = sshll.u32 [#allocation9], 4
          %s215 = int_to_ptr.vmem [resolvable:$true] %s214
          %220 = dma.hbm_to_vmem [thread:$0]  %s213, 1024, %s215, [#allocation10], 64, 64, 4
        $region20: #{tpu_custom_call.1} parent=11 // pred_fallthru
          _
        // Predicated region
        $region21: #{tpu_custom_call.1} parent=11 // pred_check
          %p221 = pneg %p150
        $region22: #{tpu_custom_call.1} parent=11 // pred_check_branch
          %223 = sbr.rel (%p221) target = $region24
        $region23: #{tpu_custom_call.1} parent=11 // pred_region
          _
        $region24: #{tpu_custom_call.1} parent=11 // pred_fallthru
          _
      $region12: #{tpu_custom_call.1} parent=5 // pred_fallthru
        _
      %p224 = scmp.lt.s32.totalorder %s21, 2
      // Predicated region
      $region25: #{tpu_custom_call.1} parent=5 // pred_check
        %p225 = pneg %p224
      $region26: #{tpu_custom_call.1} parent=5 // pred_check_branch
        %227 = sbr.rel (%p225) target = $region28
      $region27: #{tpu_custom_call.1} parent=5 // pred_region
        // Predicated region
        $region29: #{tpu_custom_call.1} parent=27 // pred_check
          %p228 = pneg %p53
        $region30: #{tpu_custom_call.1} parent=27 // pred_check_branch
          %230 = sbr.rel (%p228) target = $region32
        $region31: #{tpu_custom_call.1} parent=27 // pred_region
          %s231 = sand.u32 %s43, 1
          %s232 = scalar_lea.sflag [#allocation4], %s231
          %s233 = sand.u32 %s43, 1
          %s234 = smul.addr %s233, 4
          %s235 = scalar_lea.vmem [#allocation3], %s234
          %237 = vsyncadd %s232, 0
          %s238 = smul.addr %s28, 4
          %s239 = scalar_lea.hbm %s0, %s238
          %s241 = sshll.u32 %s239, 4
          %s242 = int_to_ptr.hbm [resolvable:$true] %s241
          %s243 = sshll.u32 %s235, 4
          %s244 = int_to_ptr.vmem [resolvable:$true] %s243
          %246 = dma.hbm_to_vmem [thread:$0]  %s242, 64, %s244, %s232
        $region32: #{tpu_custom_call.1} parent=27 // pred_fallthru
          _
        // Predicated region
        $region33: #{tpu_custom_call.1} parent=27 // pred_check
          %p247 = pneg %p81
        $region34: #{tpu_custom_call.1} parent=27 // pred_check_branch
          %249 = sbr.rel (%p247) target = $region36
        $region35: #{tpu_custom_call.1} parent=27 // pred_region
          %s250 = sand.u32 %s21, 1
          %s251 = scalar_lea.sflag [#allocation7], %s250
          %s252 = sand.u32 %s71, 1
          %s253 = smul.addr %s252, 4
          %s254 = scalar_lea.vmem [#allocation6], %s253
          %256 = vsyncadd %s251, 0
          %s257 = sadd.s32 %s29, %s28
          %s258 = smul.addr %s257, 4
          %s259 = scalar_lea.hbm %s1, %s258
          %s261 = sshll.u32 %s259, 4
          %s262 = int_to_ptr.hbm [resolvable:$true] %s261
          %s263 = sshll.u32 %s254, 4
          %s264 = int_to_ptr.vmem [resolvable:$true] %s263
          %266 = dma.hbm_to_vmem [thread:$0]  %s262, 64, %s264, %s251
        $region36: #{tpu_custom_call.1} parent=27 // pred_fallthru
          _
      $region28: #{tpu_custom_call.1} parent=5 // pred_fallthru
        _
      %p267 = scmp.le.s32.totalorder 1, %s21
      %p268 = scmp.lt.s32.totalorder %s21, 3
      %p269 = pnand %p267, %p268
      %p270 = pneg %p269
      // Predicated region
      $region37: #{tpu_custom_call.1} parent=5 // pred_check
        _
      $region38: #{tpu_custom_call.1} parent=5 // pred_check_branch
        %272 = sbr.rel (%p269) target = $region40
      $region39: #{tpu_custom_call.1} parent=5 // pred_region
        %s273 = ssub.s32 %s21, 1
        %s274 = sand.u32 %s46, 1
        %s275 = scalar_lea.sflag [#allocation4], %s274
        %s276 = sand.u32 %s46, 1
        %s277 = smul.addr %s276, 4
        %s278 = scalar_lea.vmem [#allocation3], %s277
        // Predicated region
        $region41: #{tpu_custom_call.1} parent=39 // pred_check
          %p279 = pneg %p59
        $region42: #{tpu_custom_call.1} parent=39 // pred_check_branch
          %281 = sbr.rel (%p279) target = $region44
        $region43: #{tpu_custom_call.1} parent=39 // pred_region
          %283 = dma.done %s275, 64
        $region44: #{tpu_custom_call.1} parent=39 // pred_fallthru
          _
        %s284 = sand.u32 %s26, 1
        %s285 = scalar_lea.sflag [#allocation7], %s284
        %s286 = sand.u32 %s74, 1
        %s287 = smul.addr %s286, 4
        %s288 = scalar_lea.vmem [#allocation6], %s287
        // Predicated region
        $region45: #{tpu_custom_call.1} parent=39 // pred_check
          %p289 = pneg %p87
        $region46: #{tpu_custom_call.1} parent=39 // pred_check_branch
          %291 = sbr.rel (%p289) target = $region48
        $region47: #{tpu_custom_call.1} parent=39 // pred_region
          %293 = dma.done %s285, 64
        $region48: #{tpu_custom_call.1} parent=39 // pred_fallthru
          _
        // Predicated region
        $region49: #{tpu_custom_call.1} parent=39 // pred_check
          %p294 = pneg %p108
        $region50: #{tpu_custom_call.1} parent=39 // pred_check_branch
          %296 = sbr.rel (%p294) target = $region52
        $region51: #{tpu_custom_call.1} parent=39 // pred_region
          %298 = dma.done [#allocation7], 256
        $region52: #{tpu_custom_call.1} parent=39 // pred_fallthru
          _
        // Predicated region
        $region53: #{tpu_custom_call.1} parent=39 // pred_check
          %p299 = pneg %p129
        $region54: #{tpu_custom_call.1} parent=39 // pred_check_branch
          %301 = sbr.rel (%p299) target = $region56
        $region55: #{tpu_custom_call.1} parent=39 // pred_region
          %303 = dma.done [#allocation10], 1024
        $region56: #{tpu_custom_call.1} parent=39 // pred_fallthru
          _
        %s304 = sand.u32 %s46, 1
        %s305 = scalar_lea.sflag [#allocation4], %s304
        %s306 = sand.u32 %s46, 1
        %s307 = smul.addr %s306, 4
        %s308 = scalar_lea.vmem [#allocation3], %s307
        %p309 = pneg %p59
        %p310 = pneg %p56
        %s311 = sand.u32 %s26, 1
        %s312 = scalar_lea.sflag [#allocation7], %s311
        %s313 = sand.u32 %s74, 1
        %s314 = smul.addr %s313, 4
        %s315 = scalar_lea.vmem [#allocation6], %s314
        %p316 = pneg %p87
        %p317 = pneg %p84
        %p318 = pneg %p108
        %p319 = pneg %p105
        %p320 = pneg %p129
        %p321 = pneg %p126
        %p322 = pneg %p150
        %p323 = pneg %p147
        %p324 = pneg %p178
        %p325 = pneg %p175
        %s326 = sand.u32 %s165, 1
        %s327 = scalar_lea.sflag [#allocation5], %s326
        %s328 = sand.u32 %s165, 1
        %s329 = smul.addr %s328, 8
        %s330 = scalar_lea.vmem [#allocation11], %s329
        %p332 = scmp.eq.s32.totalorder %s31, 0
        // Predicated region
        $region57: #{tpu_custom_call.1} parent=39 // pred_check
          %p333 = pneg %p332
        $region58: #{tpu_custom_call.1} parent=39 // pred_check_branch
          %335 = sbr.rel (%p333) target = $region60
        $region59: #{tpu_custom_call.1} parent=39 // pred_region
          %v336 = vld [vmem:[%s278] sm:$0xf]
          %v337 = vld [vmem:[#allocation8] sm:$0xff]
          %v338 = vld [vmem:[#allocation8 + $0x8] sm:$0xff]
          %v341 = vunpack.c.l.b16 %v337
          %v342 = vunpack.c.h.b16 %v337
          %v343 = vunpack.c.l.b16 %v338
          %v344 = vunpack.c.h.b16 %v338
          %v345 = vpack.c.b16 %v343, %v341
          %v346 = vpack.c.b16 %v344, %v342
          %vm349 = vcmask 130048
          %v351 = vsel %vm349, %v336, 0
          %353 = vmatpush.bf16.msra.mxu0 0
          %354 = vmatpush.bf16.msra.mxu0 0
          %355 = vmatpush.bf16.msra.mxu0 0
          %356 = vmatpush.bf16.msra.mxu0 0
          %357 = vmatpush.bf16.msra.mxu0 0
          %358 = vmatpush.bf16.msra.mxu0 0
          %359 = vmatpush.bf16.msra.mxu0 0
          %360 = vmatpush.bf16.msra.mxu0 %v345
          %361 = vmatmul.bf16.gmra.mxu0 %v351
          %v362 = vpop.f32.mrf.mxu0
          %v363 = vadd.f32 0.0, %v362
          %v364 = vpop.f32.mrf.mxu0
          %365 = vdwg.mxu0
          %366 = vmatpush.bf16.msra.mxu0 0
          %367 = vmatpush.bf16.msra.mxu0 0
          %368 = vmatpush.bf16.msra.mxu0 0
          %369 = vmatpush.bf16.msra.mxu0 0
          %370 = vmatpush.bf16.msra.mxu0 0
          %371 = vmatpush.bf16.msra.mxu0 0
          %372 = vmatpush.bf16.msra.mxu0 0
          %373 = vmatpush.bf16.msra.mxu0 %v346
          %374 = vmatmul.bf16.gmra.mxu0 %v351
          %v375 = vpop.f32.mrf.mxu0
          %v376 = vadd.f32 0.0, %v375
          %v377 = vpop.f32.mrf.mxu0
          %378 = vdwg.mxu0
          %379 = vst [vmem:[#allocation2] sm:$0xff] %v363
          %380 = vst [vmem:[#allocation2 + $0x8] sm:$0xff] %v376
        $region60: #{tpu_custom_call.1} parent=39 // pred_fallthru
          _
        %s381 = smul.u32 %s31, 8
        %v382 = vld [vmem:[#allocation2] sm:$0xff]
        %s383 = sshra.s32 %s381, 3
        %s384 = sand.u32 %s381, 7
        %s385 = smul.u32 %s383, 2
        %s386 = smul.addr %s385, 8
        %s387 = scalar_lea.vmem [#allocation2], %s386
        %v388 = vld [vmem:[%s387 + $0x8] sm:$0xff]
        %v390 = vrot.slane %v388, 1
        %v391 = vrot.slane %v388, 2
        %v392 = vrot.slane %v388, 3
        %v393 = vrot.slane %v388, 4
        %v394 = vrot.slane %v388, 5
        %v395 = vrot.slane %v388, 6
        %v396 = vrot.slane %v388, 7
        %v397 = vperm.slane %v388, 0
        %v398 = vperm.slane %v390, 0
        %v399 = vperm.slane %v391, 0
        %v400 = vperm.slane %v392, 0
        %v401 = vperm.slane %v393, 0
        %v402 = vperm.slane %v394, 0
        %v403 = vperm.slane %v395, 0
        %v404 = vperm.slane %v396, 0
        %v413 = vadd.f32 %v397, %v382
        %v414 = vadd.f32 %v398, %v382
        %v415 = vadd.f32 %v399, %v382
        %v416 = vadd.f32 %v400, %v382
        %v417 = vadd.f32 %v401, %v382
        %v418 = vadd.f32 %v402, %v382
        %v419 = vadd.f32 %v403, %v382
        %v420 = vadd.f32 %v404, %v382
        %v421 = vmax.f32 %v413, 0.0
        %v422 = vmax.f32 %v414, 0.0
        %v423 = vmax.f32 %v415, 0.0
        %v424 = vmax.f32 %v416, 0.0
        %v425 = vmax.f32 %v417, 0.0
        %v426 = vmax.f32 %v418, 0.0
        %v427 = vmax.f32 %v419, 0.0
        %v428 = vmax.f32 %v420, 0.0
        %v429 = vpack.c.bf16 %v422, %v421
        %v430 = vpack.c.bf16 %v424, %v423
        %v431 = vpack.c.bf16 %v426, %v425
        %v432 = vpack.c.bf16 %v428, %v427
        %v433 = vld [vmem:[#allocation9] sm:$0xf]
        %v434 = vld [vmem:[#allocation9 + $0x4] sm:$0xf]
        %v435 = vld [vmem:[#allocation9 + $0x8] sm:$0xf]
        %v436 = vld [vmem:[#allocation9 + $0xc] sm:$0xf]
        %v437 = vld [vmem:[#allocation9 + $0x10] sm:$0xf]
        %v438 = vld [vmem:[#allocation9 + $0x14] sm:$0xf]
        %v439 = vld [vmem:[#allocation9 + $0x18] sm:$0xf]
        %v440 = vld [vmem:[#allocation9 + $0x1c] sm:$0xf]
        %v441 = vld [vmem:[#allocation9 + $0x20] sm:$0xf]
        %v442 = vld [vmem:[#allocation9 + $0x24] sm:$0xf]
        %v443 = vld [vmem:[#allocation9 + $0x28] sm:$0xf]
        %v444 = vld [vmem:[#allocation9 + $0x2c] sm:$0xf]
        %v445 = vld [vmem:[#allocation9 + $0x30] sm:$0xf]
        %v446 = vld [vmem:[#allocation9 + $0x34] sm:$0xf]
        %v447 = vld [vmem:[#allocation9 + $0x38] sm:$0xf]
        %v448 = vld [vmem:[#allocation9 + $0x3c] sm:$0xf]
        %v465 = vunpack.c.l.b16 %v433
        %v466 = vunpack.c.l.b16 %v434
        %v467 = vunpack.c.l.b16 %v435
        %v468 = vunpack.c.l.b16 %v436
        %v469 = vunpack.c.l.b16 %v437
        %v470 = vunpack.c.l.b16 %v438
        %v471 = vunpack.c.l.b16 %v439
        %v472 = vunpack.c.l.b16 %v440
        %v473 = vunpack.c.l.b16 %v441
        %v474 = vunpack.c.l.b16 %v442
        %v475 = vunpack.c.l.b16 %v443
        %v476 = vunpack.c.l.b16 %v444
        %v477 = vunpack.c.l.b16 %v445
        %v478 = vunpack.c.l.b16 %v446
        %v479 = vunpack.c.l.b16 %v447
        %v480 = vunpack.c.l.b16 %v448
        %v481 = vpack.c.b16 %v466, %v465
        %v482 = vpack.c.b16 %v468, %v467
        %v483 = vpack.c.b16 %v470, %v469
        %v484 = vpack.c.b16 %v472, %v471
        %v485 = vpack.c.b16 %v474, %v473
        %v486 = vpack.c.b16 %v476, %v475
        %v487 = vpack.c.b16 %v478, %v477
        %v488 = vpack.c.b16 %v480, %v479
        %497 = vmatpush.bf16.msra.mxu0 %v488
        %498 = vmatpush.bf16.msra.mxu0 %v487
        %499 = vmatpush.bf16.msra.mxu0 %v486
        %500 = vmatpush.bf16.msra.mxu0 %v485
        %501 = vmatpush.bf16.msra.mxu0 %v484
        %502 = vmatpush.bf16.msra.mxu0 %v483
        %503 = vmatpush.bf16.msra.mxu0 %v482
        %504 = vmatpush.bf16.msra.mxu0 %v481
        %505 = vmatmul.bf16.gmra.mxu0 %v429
        %v506 = vpop.f32.mrf.mxu0
        %v507 = vadd.f32 0.0, %v506
        %v508 = vpop.f32.mrf.mxu0
        %v509 = vadd.f32 0.0, %v508
        %510 = vmatmul.bf16.gmra.mxu0 %v430
        %v511 = vpop.f32.mrf.mxu0
        %v512 = vadd.f32 0.0, %v511
        %v513 = vpop.f32.mrf.mxu0
        %v514 = vadd.f32 0.0, %v513
        %515 = vmatmul.bf16.gmra.mxu0 %v431
        %v516 = vpop.f32.mrf.mxu0
        %v517 = vadd.f32 0.0, %v516
        %v518 = vpop.f32.mrf.mxu0
        %v519 = vadd.f32 0.0, %v518
        %520 = vmatmul.bf16.gmra.mxu0 %v432
        %v521 = vpop.f32.mrf.mxu0
        %v522 = vadd.f32 0.0, %v521
        %v523 = vpop.f32.mrf.mxu0
        %v524 = vadd.f32 0.0, %v523
        %525 = vdwg.mxu0
        %v526 = vmax.f32 %v507, 0.0
        %v527 = vmax.f32 %v509, 0.0
        %v528 = vmax.f32 %v512, 0.0
        %v529 = vmax.f32 %v514, 0.0
        %v530 = vmax.f32 %v517, 0.0
        %v531 = vmax.f32 %v519, 0.0
        %v532 = vmax.f32 %v522, 0.0
        %v533 = vmax.f32 %v524, 0.0
        %v534 = vld [vmem:[%s4] sm:$0x1]
        %v536 = vperm.slane %v534, 0
        %v538 = vmul.f32 %v526, %v536
        %v539 = vmul.f32 %v527, %v536
        %v540 = vmul.f32 %v528, %v536
        %v541 = vmul.f32 %v529, %v536
        %v542 = vmul.f32 %v530, %v536
        %v543 = vmul.f32 %v531, %v536
        %v544 = vmul.f32 %v532, %v536
        %v545 = vmul.f32 %v533, %v536
        %546 = vadd.xlane.f32.xlu0 %v538
        %v547 = vpop.xlane.xlu0 %546
        %548 = vadd.xlane.f32.xlu0 %v539
        %v549 = vpop.xlane.xlu0 %548
        %550 = vadd.xlane.f32.xlu0 %v540
        %v551 = vpop.xlane.xlu0 %550
        %552 = vadd.xlane.f32.xlu0 %v541
        %v553 = vpop.xlane.xlu0 %552
        %554 = vadd.xlane.f32.xlu0 %v542
        %v555 = vpop.xlane.xlu0 %554
        %556 = vadd.xlane.f32.xlu0 %v543
        %v557 = vpop.xlane.xlu0 %556
        %558 = vadd.xlane.f32.xlu0 %v544
        %v559 = vpop.xlane.xlu0 %558
        %560 = vadd.xlane.f32.xlu0 %v545
        %v561 = vpop.xlane.xlu0 %560
        %v562 = vxor.u32 %v547, 2147483648
        %v563 = vxor.u32 %v549, 2147483648
        %v564 = vxor.u32 %v551, 2147483648
        %v565 = vxor.u32 %v553, 2147483648
        %v566 = vxor.u32 %v555, 2147483648
        %v567 = vxor.u32 %v557, 2147483648
        %v568 = vxor.u32 %v559, 2147483648
        %v569 = vxor.u32 %v561, 2147483648
        %v570 = vmul.f32 %v562, 1.442695
        %v571 = vpow.pop %v570
        %v572 = vmul.f32 %v563, 1.442695
        %v573 = vpow.pop %v572
        %v574 = vmul.f32 %v564, 1.442695
        %v575 = vpow.pop %v574
        %v576 = vmul.f32 %v565, 1.442695
        %v577 = vpow.pop %v576
        %v578 = vmul.f32 %v566, 1.442695
        %v579 = vpow.pop %v578
        %v580 = vmul.f32 %v567, 1.442695
        %v581 = vpow.pop %v580
        %v582 = vmul.f32 %v568, 1.442695
        %v583 = vpow.pop %v582
        %v584 = vmul.f32 %v569, 1.442695
        %v585 = vpow.pop %v584
        %v586 = vadd.f32 %v571, 1.0
        %v587 = vadd.f32 %v573, 1.0
        %v588 = vadd.f32 %v575, 1.0
        %v589 = vadd.f32 %v577, 1.0
        %v590 = vadd.f32 %v579, 1.0
        %v591 = vadd.f32 %v581, 1.0
        %v592 = vadd.f32 %v583, 1.0
        %v593 = vadd.f32 %v585, 1.0
        %v594 = vrcp.pop %v586
        %v595 = vmul.f32 %v586, %v594
        %v596 = vsub.f32 1.0, %v595
        %v597 = vmul.f32 %v594, %v596
        %v598 = vadd.f32 %v594, %v597
        %vm599 = vweird.f32 %v586
        %vm600 = vweird.f32 %v594
        %vm601 = vmor %vm599, %vm600
        %v602 = vsel %vm601, %v594, %v598
        %v603 = vand.u32 2147483647, %v586
        %vm604 = vcmp.eq.f32.partialorder %v603, 8.507059e+37
        %v605 = vand.u32 %v586, 2147483648
        %v606 = vor.u32 1.1754944e-38, %v605
        %v607 = vsel %vm604, %v606, %v602
        %v608 = vmul.f32 1.0, %v607
        %v609 = vrcp.pop %v587
        %v610 = vmul.f32 %v587, %v609
        %v611 = vsub.f32 1.0, %v610
        %v612 = vmul.f32 %v609, %v611
        %v613 = vadd.f32 %v609, %v612
        %vm614 = vweird.f32 %v587
        %vm615 = vweird.f32 %v609
        %vm616 = vmor %vm614, %vm615
        %v617 = vsel %vm616, %v609, %v613
        %v618 = vand.u32 2147483647, %v587
        %vm619 = vcmp.eq.f32.partialorder %v618, 8.507059e+37
        %v620 = vand.u32 %v587, 2147483648
        %v621 = vor.u32 1.1754944e-38, %v620
        %v622 = vsel %vm619, %v621, %v617
        %v623 = vmul.f32 1.0, %v622
        %v624 = vrcp.pop %v588
        %v625 = vmul.f32 %v588, %v624
        %v626 = vsub.f32 1.0, %v625
        %v627 = vmul.f32 %v624, %v626
        %v628 = vadd.f32 %v624, %v627
        %vm629 = vweird.f32 %v588
        %vm630 = vweird.f32 %v624
        %vm631 = vmor %vm629, %vm630
        %v632 = vsel %vm631, %v624, %v628
        %v633 = vand.u32 2147483647, %v588
        %vm634 = vcmp.eq.f32.partialorder %v633, 8.507059e+37
        %v635 = vand.u32 %v588, 2147483648
        %v636 = vor.u32 1.1754944e-38, %v635
        %v637 = vsel %vm634, %v636, %v632
        %v638 = vmul.f32 1.0, %v637
        %v639 = vrcp.pop %v589
        %v640 = vmul.f32 %v589, %v639
        %v641 = vsub.f32 1.0, %v640
        %v642 = vmul.f32 %v639, %v641
        %v643 = vadd.f32 %v639, %v642
        %vm644 = vweird.f32 %v589
        %vm645 = vweird.f32 %v639
        %vm646 = vmor %vm644, %vm645
        %v647 = vsel %vm646, %v639, %v643
        %v648 = vand.u32 2147483647, %v589
        %vm649 = vcmp.eq.f32.partialorder %v648, 8.507059e+37
        %v650 = vand.u32 %v589, 2147483648
        %v651 = vor.u32 1.1754944e-38, %v650
        %v652 = vsel %vm649, %v651, %v647
        %v653 = vmul.f32 1.0, %v652
        %v654 = vrcp.pop %v590
        %v655 = vmul.f32 %v590, %v654
        %v656 = vsub.f32 1.0, %v655
        %v657 = vmul.f32 %v654, %v656
        %v658 = vadd.f32 %v654, %v657
        %vm659 = vweird.f32 %v590
        %vm660 = vweird.f32 %v654
        %vm661 = vmor %vm659, %vm660
        %v662 = vsel %vm661, %v654, %v658
        %v663 = vand.u32 2147483647, %v590
        %vm664 = vcmp.eq.f32.partialorder %v663, 8.507059e+37
        %v665 = vand.u32 %v590, 2147483648
        %v666 = vor.u32 1.1754944e-38, %v665
        %v667 = vsel %vm664, %v666, %v662
        %v668 = vmul.f32 1.0, %v667
        %v669 = vrcp.pop %v591
        %v670 = vmul.f32 %v591, %v669
        %v671 = vsub.f32 1.0, %v670
        %v672 = vmul.f32 %v669, %v671
        %v673 = vadd.f32 %v669, %v672
        %vm674 = vweird.f32 %v591
        %vm675 = vweird.f32 %v669
        %vm676 = vmor %vm674, %vm675
        %v677 = vsel %vm676, %v669, %v673
        %v678 = vand.u32 2147483647, %v591
        %vm679 = vcmp.eq.f32.partialorder %v678, 8.507059e+37
        %v680 = vand.u32 %v591, 2147483648
        %v681 = vor.u32 1.1754944e-38, %v680
        %v682 = vsel %vm679, %v681, %v677
        %v683 = vmul.f32 1.0, %v682
        %v684 = vrcp.pop %v592
        %v685 = vmul.f32 %v592, %v684
        %v686 = vsub.f32 1.0, %v685
        %v687 = vmul.f32 %v684, %v686
        %v688 = vadd.f32 %v684, %v687
        %vm689 = vweird.f32 %v592
        %vm690 = vweird.f32 %v684
        %vm691 = vmor %vm689, %vm690
        %v692 = vsel %vm691, %v684, %v688
        %v693 = vand.u32 2147483647, %v592
        %vm694 = vcmp.eq.f32.partialorder %v693, 8.507059e+37
        %v695 = vand.u32 %v592, 2147483648
        %v696 = vor.u32 1.1754944e-38, %v695
        %v697 = vsel %vm694, %v696, %v692
        %v698 = vmul.f32 1.0, %v697
        %v699 = vrcp.pop %v593
        %v700 = vmul.f32 %v593, %v699
        %v701 = vsub.f32 1.0, %v700
        %v702 = vmul.f32 %v699, %v701
        %v703 = vadd.f32 %v699, %v702
        %vm704 = vweird.f32 %v593
        %vm705 = vweird.f32 %v699
        %vm706 = vmor %vm704, %vm705
        %v707 = vsel %vm706, %v699, %v703
        %v708 = vand.u32 2147483647, %v593
        %vm709 = vcmp.eq.f32.partialorder %v708, 8.507059e+37
        %v710 = vand.u32 %v593, 2147483648
        %v711 = vor.u32 1.1754944e-38, %v710
        %v712 = vsel %vm709, %v711, %v707
        %v713 = vmul.f32 1.0, %v712
        %v714 = vld [vmem:[%s288] sm:$0xf]
        %v715 = vunpack.c.l.bf16 %v714
        %v717 = vperm.slane %v715, 0
        %v718 = vlaneseq
        %v719 = vshrl.u32 %v718, 7
        %721 = vset.pattern.permute.xlu0 %v719
        %722 = vperm.xlu0 %721, %v717
        %v723 = vpop.permute.xlu0 %722
        %v724 = vperm.slane %v715, 1
        %v725 = vlaneseq
        %v726 = vshrl.u32 %v725, 7
        %728 = vset.pattern.permute.xlu0 %v726
        %729 = vperm.xlu0 %728, %v724
        %v730 = vpop.permute.xlu0 %729
        %v731 = vperm.slane %v715, 2
        %v732 = vlaneseq
        %v733 = vshrl.u32 %v732, 7
        %735 = vset.pattern.permute.xlu0 %v733
        %736 = vperm.xlu0 %735, %v731
        %v737 = vpop.permute.xlu0 %736
        %v738 = vperm.slane %v715, 3
        %v739 = vlaneseq
        %v740 = vshrl.u32 %v739, 7
        %742 = vset.pattern.permute.xlu0 %v740
        %743 = vperm.xlu0 %742, %v738
        %v744 = vpop.permute.xlu0 %743
        %v745 = vperm.slane %v715, 4
        %v746 = vlaneseq
        %v747 = vshrl.u32 %v746, 7
        %749 = vset.pattern.permute.xlu0 %v747
        %750 = vperm.xlu0 %749, %v745
        %v751 = vpop.permute.xlu0 %750
        %v752 = vperm.slane %v715, 5
        %v753 = vlaneseq
        %v754 = vshrl.u32 %v753, 7
        %756 = vset.pattern.permute.xlu0 %v754
        %757 = vperm.xlu0 %756, %v752
        %v758 = vpop.permute.xlu0 %757
        %v759 = vperm.slane %v715, 6
        %v760 = vlaneseq
        %v761 = vshrl.u32 %v760, 7
        %763 = vset.pattern.permute.xlu0 %v761
        %764 = vperm.xlu0 %763, %v759
        %v765 = vpop.permute.xlu0 %764
        %v766 = vperm.slane %v715, 7
        %v767 = vlaneseq
        %v768 = vshrl.u32 %v767, 7
        %770 = vset.pattern.permute.xlu0 %v768
        %771 = vperm.xlu0 %770, %v766
        %v772 = vpop.permute.xlu0 %771
        %v781 = vmul.f32 %v608, %v723
        %v782 = vmul.f32 %v623, %v730
        %v783 = vmul.f32 %v638, %v737
        %v784 = vmul.f32 %v653, %v744
        %v785 = vmul.f32 %v668, %v751
        %v786 = vmul.f32 %v683, %v758
        %v787 = vmul.f32 %v698, %v765
        %v788 = vmul.f32 %v713, %v772
        %797 = vset.pattern.permute.xlu0 0
        %798 = vperm.xlu0 %797, %v781
        %v799 = vpop.permute.xlu0 %798
        %800 = vset.pattern.permute.xlu0 0
        %801 = vperm.xlu0 %800, %v782
        %v802 = vpop.permute.xlu0 %801
        %803 = vset.pattern.permute.xlu0 0
        %804 = vperm.xlu0 %803, %v783
        %v805 = vpop.permute.xlu0 %804
        %806 = vset.pattern.permute.xlu0 0
        %807 = vperm.xlu0 %806, %v784
        %v808 = vpop.permute.xlu0 %807
        %809 = vset.pattern.permute.xlu0 0
        %810 = vperm.xlu0 %809, %v785
        %v811 = vpop.permute.xlu0 %810
        %812 = vset.pattern.permute.xlu0 0
        %813 = vperm.xlu0 %812, %v786
        %v814 = vpop.permute.xlu0 %813
        %815 = vset.pattern.permute.xlu0 0
        %816 = vperm.xlu0 %815, %v787
        %v817 = vpop.permute.xlu0 %816
        %818 = vset.pattern.permute.xlu0 0
        %819 = vperm.xlu0 %818, %v788
        %v820 = vpop.permute.xlu0 %819
        %v821 = vlaneseq
        %v822 = vand.u32 %v821, 127
        %v823 = vperm.slane %v799, %v822
        %v824 = vperm.slane %v802, %v822
        %v825 = vperm.slane %v805, %v822
        %v826 = vperm.slane %v808, %v822
        %v827 = vperm.slane %v811, %v822
        %v828 = vperm.slane %v814, %v822
        %v829 = vperm.slane %v817, %v822
        %v830 = vperm.slane %v820, %v822
        %vm831 = vcmask 1041409
        %v832 = vsel %vm831, %v824, %v823
        %vm833 = vcmask 1042434
        %v834 = vsel %vm833, %v825, %v832
        %vm835 = vcmask 1043459
        %v836 = vsel %vm835, %v826, %v834
        %vm837 = vcmask 1044484
        %v838 = vsel %vm837, %v827, %v836
        %vm839 = vcmask 1045509
        %v840 = vsel %vm839, %v828, %v838
        %vm841 = vcmask 1046534
        %v842 = vsel %vm841, %v829, %v840
        %vm843 = vcmask 1047559
        %v844 = vsel %vm843, %v830, %v842
        %vm846 = vcmask 64512
        %847 = vst.msk [vmem:[%s330] sm:$0xff] %vm846, %v844
        %s848 = sand.u32 %s165, 1
        %s849 = scalar_lea.sflag [#allocation5], %s848
        %s850 = sand.u32 %s165, 1
        %s851 = smul.addr %s850, 8
        %s852 = scalar_lea.vmem [#allocation11], %s851
        // Predicated region
        $region61: #{tpu_custom_call.1} parent=39 // pred_check
          %p853 = pneg %p175
        $region62: #{tpu_custom_call.1} parent=39 // pred_check_branch
          %855 = sbr.rel (%p853) target = $region64
        $region63: #{tpu_custom_call.1} parent=39 // pred_region
          %857 = vsyncadd %s849, 0
          %s858 = sadd.s32 %s31, %s30
          %s859 = smul.addr %s858, 8
          %s860 = scalar_lea.hbm %s5, %s859
          %s862 = sshll.u32 %s852, 4
          %s863 = int_to_ptr.vmem [resolvable:$true] %s862
          %s864 = sshll.u32 %s860, 4
          %s865 = int_to_ptr.hbm [resolvable:$true] %s864
          %867 = dma.vmem_to_hbm [thread:$0]  %s863, 128, %s865, %s849
        $region64: #{tpu_custom_call.1} parent=39 // pred_fallthru
          _
      $region40: #{tpu_custom_call.1} parent=5 // pred_fallthru
        _
      %p868 = scmp.le.s32.totalorder 2, %s21
      // Predicated region
      $region65: #{tpu_custom_call.1} parent=5 // pred_check
        %p869 = pneg %p868
      $region66: #{tpu_custom_call.1} parent=5 // pred_check_branch
        %871 = sbr.rel (%p869) target = $region68
      $region67: #{tpu_custom_call.1} parent=5 // pred_region
        %s872 = ssub.s32 %s21, 2
        // Predicated region
        $region69: #{tpu_custom_call.1} parent=67 // pred_check
          %p873 = pneg %p181
        $region70: #{tpu_custom_call.1} parent=67 // pred_check_branch
          %875 = sbr.rel (%p873) target = $region72
        $region71: #{tpu_custom_call.1} parent=67 // pred_region
          %s876 = sand.u32 %s166, 1
          %s877 = scalar_lea.sflag [#allocation5], %s876
          %s878 = sand.u32 %s166, 1
          %s879 = smul.addr %s878, 8
          %s880 = scalar_lea.vmem [#allocation11], %s879
          %882 = dma.done %s877, 128
        $region72: #{tpu_custom_call.1} parent=67 // pred_fallthru
          _
      $region68: #{tpu_custom_call.1} parent=5 // pred_fallthru
        _
    $region6: #{tpu_custom_call.1} parent=1 // loop_footer
      %s25 = sadd.s32 1, %s21
    $region7: #{tpu_custom_call.1} parent=1 // loop_footer_branch
      %20 = sbr.rel target = $region3
    $region8: #{tpu_custom_call.1} parent=1 // loop_exit
      _
    %883 = vsyncpa [#allocation4], 1
    %s884 = scalar_lea.sflag [#allocation4], 1
    %885 = vsyncpa %s884, 1
    %886 = vsyncpa [#allocation7], 1
    %s887 = scalar_lea.sflag [#allocation7], 1
    %888 = vsyncpa %s887, 1
    %889 = vsyncpa [#allocation10], 1
    %890 = vsyncpa [#allocation5], 1
    %s891 = scalar_lea.sflag [#allocation5], 1
    %892 = vsyncpa %s891, 1

</llo_original>
